<compile_context>
chip_gen: v7x
topology: tpu7x:2x2x1
jax: 0.10.0
libtpu: 0.0.40
codegen_flags: <defaults>
</compile_context>

<pallas_src>
from functools import partial
import math

import jax
import jax.numpy as jnp
from jax import lax
from jax.experimental import pallas as pl
from jax.experimental.pallas import tpu as pltpu


def _fused_embed_kernel(xv_ref, xo_ref, xm_ref,
                        wv_ref, wo_ref, wm_ref,
                        bv_ref, bo_ref, bm_ref,
                        ov_ref, oo_ref, om_ref):
    # Three independent patch matmuls per grid step (unrolled at trace time).
    # x block: (tmg, G*CK); weight: block-diagonal (G*CK, G*D); bias: (1, G*D).
    for x_ref, w_ref, b_ref, o_ref in (
            (xv_ref, wv_ref, bv_ref, ov_ref),
            (xo_ref, wo_ref, bo_ref, oo_ref),
            (xm_ref, wm_ref, bm_ref, om_ref)):
        acc = jnp.dot(x_ref[...], w_ref[...],
                      preferred_element_type=jnp.float32)
        o_ref[...] = jnp.maximum(acc + b_ref[...], 0.0).astype(o_ref.dtype)


def _choose_group(d_model, ck):
    """Rows packed per lane slab: G*D a multiple of 128 in ~[256, 512] and
    G*CK >= 128 when that keeps G*D <= 1024 lanes."""
    if d_model >= 128:
        return 1
    g = 128 // math.gcd(d_model, 128)            # smallest G with (G*D) % 128 == 0
    if g * d_model > 1024:                       # badly aligned D: just reach >=128 lanes
        return -(-128 // d_model)
    while (g * d_model < 256 or g * ck < 128) and g * d_model * 2 <= 1024:
        g *= 2
    return g


def _pack_conv_params(weight, bias, G):
    """Conv1d weight (D, C, K) -> block-diagonal matmul weight (G*CK, G*D)."""
    D, C, K = weight.shape
    wf = weight.reshape(D, C * K).T.astype(jnp.float32)          # (CK, D)
    if G > 1:
        wf = jnp.kron(jnp.eye(G, dtype=jnp.float32), wf)         # (G*CK, G*D)
    bg = jnp.tile(bias.astype(jnp.float32), G).reshape(1, G * D)
    return wf, bg


def prepare_params(raw_params, t_patch_size):
    """One-time packing of the three Conv1d weights (hoisted out of the
    per-forward path).  G / D are recoverable from shapes inside the jit."""
    D, C, K = raw_params["w_val"].shape
    assert K == t_patch_size
    G = _choose_group(D, C * K)
    packed = {}
    for name in ("val", "obs", "mask"):
        w, b = _pack_conv_params(raw_params["w_" + name],
                                 raw_params["b_" + name], G)
        packed["w_" + name] = w
        packed["b_" + name] = b
    return packed


def _row_tile(mg, bytes_per_row, target_step_bytes):
    """Grouped-row tile: ~target bytes of in+out HBM traffic per grid step,
    multiple of 8, but keep >= 4 grid steps when the problem allows."""
    tmg = max((target_step_bytes // bytes_per_row) // 8 * 8, 8)
    quarter = (mg // 4) // 8 * 8
    if quarter >= 8:
        tmg = min(tmg, quarter)
    if tmg >= mg:
        tmg = mg                      # single full-extent block for tiny problems
    return tmg


@partial(jax.jit, static_argnames=("t_patch_size", "target_step_bytes"))
def data_embedding2_forward(x, obs, mask, packed, t_patch_size,
                            target_step_bytes=4 << 20):
    """Forward of DataEmbedding2 -> (TokenEmb, ObsEmb, MaskEmb), each (B, P, D)."""
    B, C, T = x.shape
    K = t_patch_size
    P = T // K
    CK = C * K
    M = B * P

    wv = packed["w_val"]
    G = wv.shape[0] // CK
    D = wv.shape[1] // G
    Mpad = -(-M // G) * G
    Mg = Mpad // G

    def patchify(a):
        # .float() + drop conv remainder (VALID) + patch-major view; pure layout
        # ops that allow_input_fusion folds into the kernel's input DMA.
        a = a.astype(jnp.float32)[:, :, : P * K]
        a = a.reshape(B, C, P, K).transpose(0, 2, 1, 3).reshape(M, CK)
        if Mpad != M:
            a = jnp.pad(a, ((0, Mpad - M), (0, 0)))
        return a.reshape(Mg, G * CK)

    xg, og, mg_ = patchify(x), patchify(obs), patchify(mask)

    bytes_per_row = 3 * (G * CK + G * D) * 4          # f32 in + out per grouped row
    tmg = _row_tile(Mg, bytes_per_row, target_step_bytes)
    grid = (pl.cdiv(Mg, tmg),)                        # ragged tail handled by Pallas

    row_spec = pl.BlockSpec((tmg, G * CK), lambda i: (i, 0))
    w_spec = pl.BlockSpec((G * CK, G * D), lambda i: (0, 0))    # resident weight
    b_spec = pl.BlockSpec((1, G * D), lambda i: (0, 0))         # resident bias
    o_spec = pl.BlockSpec((tmg, G * D), lambda i: (i, 0))
    out_sds = jax.ShapeDtypeStruct((Mg, G * D), jnp.float32)

    # Scoped-VMEM budget: double-buffered in/out blocks + resident weights/bias,
    # with 2x headroom.  v5e default is only ~16 MiB; stay well under v7x's
    # 64 MiB physical VMEM.
    vmem_est = 2 * (3 * tmg * (G * CK + G * D) + 3 * G * CK * G * D + 3 * G * D) * 4
    vmem_limit = int(min(max(2 * vmem_est, 16 << 20), 48 << 20))

    ov, oo, om = pl.pallas_call(
        _fused_embed_kernel,
        out_shape=(out_sds, out_sds, out_sds),
        grid_spec=pltpu.PrefetchScalarGridSpec(
            num_scalar_prefetch=0,
            grid=grid,
            in_specs=[row_spec, row_spec, row_spec,
                      w_spec, w_spec, w_spec,
                      b_spec, b_spec, b_spec],
            out_specs=(o_spec, o_spec, o_spec),
        ),
        compiler_params=pltpu.CompilerParams(
            dimension_semantics=("parallel",),
            allow_input_fusion=[True, True, True,
                                False, False, False,
                                False, False, False],
            vmem_limit_bytes=vmem_limit,
        ),
    )(xg, og, mg_,
      packed["w_val"], packed["w_obs"], packed["w_mask"],
      packed["b_val"], packed["b_obs"], packed["b_mask"])

    def unpack(o):
        o = o.reshape(Mpad, D)        # (Mg, G*D) has the same layout: free reshape
        if Mpad != M:
            o = o[:M]                 # drop G-padding rows
        return o.reshape(B, P, D)

    return unpack(ov), unpack(oo), unpack(om)


if __name__ == "__main__":
    key = jax.random.PRNGKey(0)

    def conv_init(kw, kb, c_in, d_model, k):
        # Conv1d_with_init: kaiming_normal_ weight (fan_in = C*K), default
        # PyTorch bias init uniform(-1/sqrt(fan_in), 1/sqrt(fan_in)).
        fan_in = float(c_in * k)
        w = jax.random.normal(kw, (d_model, c_in, k), dtype=jnp.float32) \
            * jnp.sqrt(2.0 / fan_in)
        bound = 1.0 / jnp.sqrt(fan_in)
        b = jax.random.uniform(kb, (d_model,), minval=-bound, maxval=bound,
                               dtype=jnp.float32)
        return w, b

    def ref_embed(xi, w, b, k):
        # Reference: real strided Conv1d + ReLU + permute(0, 2, 1) in plain JAX.
        y = lax.conv_general_dilated(
            xi.astype(jnp.float32), w, window_strides=(k,), padding="VALID",
            dimension_numbers=("NCH", "OIH", "NCH"),
            precision=lax.Precision.HIGHEST)
        return jnp.maximum(y + b[None, :, None], 0.0).transpose(0, 2, 1)

    def run_case(case_key, B, C_in, T, d_model, k):
        keys = jax.random.split(case_key, 9)
        x = jax.random.normal(keys[0], (B, C_in, T), dtype=jnp.float32)
        obs = jax.random.normal(keys[1], (B, C_in, T), dtype=jnp.float32)
        mask = jax.random.bernoulli(keys[2], 0.5, (B, C_in, T)).astype(jnp.float32)
        w_val, b_val = conv_init(keys[3], keys[4], C_in, d_model, k)
        w_obs, b_obs = conv_init(keys[5], keys[6], C_in, d_model, k)
        w_msk, b_msk = conv_init(keys[7], keys[8], C_in, d_model, k)
        raw = {"w_val": w_val, "b_val": b_val,
               "w_obs": w_obs, "b_obs": b_obs,
               "w_mask": w_msk, "b_mask": b_msk}

        packed = prepare_params(raw, k)               # one-time weight packing
        outs = data_embedding2_forward(x, obs, mask, packed, t_patch_size=k)
        outs = jax.block_until_ready(outs)

        P = T // k
        for o, (xi, w, b) in zip(outs, ((x, w_val, b_val),
                                        (obs, w_obs, b_obs),
                                        (mask, w_msk, b_msk))):
            r = ref_embed(xi, w, b, k)
            assert o.shape == (B, P, d_model), o.shape
            assert jnp.allclose(o, r, atol=1e-4, rtol=1e-4), \
                f"mismatch vs reference conv (max |diff|={jnp.max(jnp.abs(o - r))})"

    k0, k1 = jax.random.split(key)
    # Primary small case (M divisible by G) plus a ragged case exercising the
    # conv-remainder drop (T % K != 0) and the row padding (M % G != 0).
    run_case(k0, B=2, C_in=4, T=32, d_model=32, k=2)
    run_case(k1, B=2, C_in=4, T=31, d_model=32, k=2)
    print("KERNEL_OK")
</pallas_src>

<mosaic_0001>
module attributes {stable_mosaic.version = 11 : i64} {
  func.func @_fused_embed_kernel(%arg0: i32, %arg1: memref<2x128xf32, #tpu.memory_space<vmem>>, %arg2: memref<2x128xf32, #tpu.memory_space<vmem>>, %arg3: memref<2x128xf32, #tpu.memory_space<vmem>>, %arg4: memref<128x512xf32, #tpu.memory_space<vmem>>, %arg5: memref<128x512xf32, #tpu.memory_space<vmem>>, %arg6: memref<128x512xf32, #tpu.memory_space<vmem>>, %arg7: memref<1x512xf32, #tpu.memory_space<vmem>>, %arg8: memref<1x512xf32, #tpu.memory_space<vmem>>, %arg9: memref<1x512xf32, #tpu.memory_space<vmem>>, %arg10: memref<2x512xf32, #tpu.memory_space<vmem>>, %arg11: memref<2x512xf32, #tpu.memory_space<vmem>>, %arg12: memref<2x512xf32, #tpu.memory_space<vmem>>) attributes {dimension_semantics = [#tpu.dimension_semantics<parallel>], iteration_bounds = array<i64: 1>, scalar_prefetch = 0 : i64, scratch_operands = 0 : i64, tpu.core_type = #tpu.core_type<tc>, window_params = [{transform_indices = @transform_0, window_bounds = array<i64: 2, 128>}, {transform_indices = @transform_1, window_bounds = array<i64: 2, 128>}, {transform_indices = @transform_2, window_bounds = array<i64: 2, 128>}, {pipeline_mode = #tpu.pipeline_mode<synchronous>, transform_indices = @transform_3, window_bounds = array<i64: 128, 512>}, {pipeline_mode = #tpu.pipeline_mode<synchronous>, transform_indices = @transform_4, window_bounds = array<i64: 128, 512>}, {pipeline_mode = #tpu.pipeline_mode<synchronous>, transform_indices = @transform_5, window_bounds = array<i64: 128, 512>}, {pipeline_mode = #tpu.pipeline_mode<synchronous>, transform_indices = @transform_6, window_bounds = array<i64: 1, 512>}, {pipeline_mode = #tpu.pipeline_mode<synchronous>, transform_indices = @transform_7, window_bounds = array<i64: 1, 512>}, {pipeline_mode = #tpu.pipeline_mode<synchronous>, transform_indices = @transform_8, window_bounds = array<i64: 1, 512>}, {transform_indices = @transform_9, window_bounds = array<i64: 2, 512>}, {transform_indices = @transform_10, window_bounds = array<i64: 2, 512>}, {transform_indices = @transform_11, window_bounds = array<i64: 2, 512>}]} {
    %c0 = arith.constant 0 : index
    %c0_0 = arith.constant 0 : index
    %0 = vector.load %arg1[%c0, %c0_0] : memref<2x128xf32, #tpu.memory_space<vmem>>, vector<2x128xf32>
    %c0_1 = arith.constant 0 : index
    %c0_2 = arith.constant 0 : index
    %1 = vector.load %arg4[%c0_1, %c0_2] : memref<128x512xf32, #tpu.memory_space<vmem>>, vector<128x512xf32>
    %cst = arith.constant dense<0.000000e+00> : vector<2x512xf32>
    %2 = tpu.matmul %0, %1, %cst {dimension_numbers = #tpu.dot_dimension_numbers<[1], [0], [0], [1], [0, 0, 1, 1], [], []>} : vector<2x128xf32>, vector<128x512xf32>, vector<2x512xf32> -> vector<2x512xf32>
    %c0_3 = arith.constant 0 : index
    %c0_4 = arith.constant 0 : index
    %3 = vector.load %arg7[%c0_3, %c0_4] : memref<1x512xf32, #tpu.memory_space<vmem>>, vector<1x512xf32>
    %4 = vector.broadcast %3 : vector<1x512xf32> to vector<2x512xf32>
    %5 = arith.addf %2, %4 : vector<2x512xf32>
    %cst_5 = arith.constant 0.000000e+00 : f32
    %6 = vector.broadcast %cst_5 : f32 to vector<2x512xf32>
    %7 = arith.maximumf %5, %6 : vector<2x512xf32>
    %c0_6 = arith.constant 0 : index
    %c0_7 = arith.constant 0 : index
    %8 = vector.load %arg10[%c0_6, %c0_7] : memref<2x512xf32, #tpu.memory_space<vmem>>, vector<2x512xf32>
    tpu.vector_store %arg10[%c0_6, %c0_7], %7 {strides = array<i32>} : memref<2x512xf32, #tpu.memory_space<vmem>>, vector<2x512xf32>,
    %c0_8 = arith.constant 0 : index
    %c0_9 = arith.constant 0 : index
    %9 = vector.load %arg2[%c0_8, %c0_9] : memref<2x128xf32, #tpu.memory_space<vmem>>, vector<2x128xf32>
    %c0_10 = arith.constant 0 : index
    %c0_11 = arith.constant 0 : index
    %10 = vector.load %arg5[%c0_10, %c0_11] : memref<128x512xf32, #tpu.memory_space<vmem>>, vector<128x512xf32>
    %cst_12 = arith.constant dense<0.000000e+00> : vector<2x512xf32>
    %11 = tpu.matmul %9, %10, %cst_12 {dimension_numbers = #tpu.dot_dimension_numbers<[1], [0], [0], [1], [0, 0, 1, 1], [], []>} : vector<2x128xf32>, vector<128x512xf32>, vector<2x512xf32> -> vector<2x512xf32>
    %c0_13 = arith.constant 0 : index
    %c0_14 = arith.constant 0 : index
    %12 = vector.load %arg8[%c0_13, %c0_14] : memref<1x512xf32, #tpu.memory_space<vmem>>, vector<1x512xf32>
    %13 = vector.broadcast %12 : vector<1x512xf32> to vector<2x512xf32>
    %14 = arith.addf %11, %13 : vector<2x512xf32>
    %cst_15 = arith.constant 0.000000e+00 : f32
    %15 = vector.broadcast %cst_15 : f32 to vector<2x512xf32>
    %16 = arith.maximumf %14, %15 : vector<2x512xf32>
    %c0_16 = arith.constant 0 : index
    %c0_17 = arith.constant 0 : index
    %17 = vector.load %arg11[%c0_16, %c0_17] : memref<2x512xf32, #tpu.memory_space<vmem>>, vector<2x512xf32>
    tpu.vector_store %arg11[%c0_16, %c0_17], %16 {strides = array<i32>} : memref<2x512xf32, #tpu.memory_space<vmem>>, vector<2x512xf32>,
    %c0_18 = arith.constant 0 : index
    %c0_19 = arith.constant 0 : index
    %18 = vector.load %arg3[%c0_18, %c0_19] : memref<2x128xf32, #tpu.memory_space<vmem>>, vector<2x128xf32>
    %c0_20 = arith.constant 0 : index
    %c0_21 = arith.constant 0 : index
    %19 = vector.load %arg6[%c0_20, %c0_21] : memref<128x512xf32, #tpu.memory_space<vmem>>, vector<128x512xf32>
    %cst_22 = arith.constant dense<0.000000e+00> : vector<2x512xf32>
    %20 = tpu.matmul %18, %19, %cst_22 {dimension_numbers = #tpu.dot_dimension_numbers<[1], [0], [0], [1], [0, 0, 1, 1], [], []>} : vector<2x128xf32>, vector<128x512xf32>, vector<2x512xf32> -> vector<2x512xf32>
    %c0_23 = arith.constant 0 : index
    %c0_24 = arith.constant 0 : index
    %21 = vector.load %arg9[%c0_23, %c0_24] : memref<1x512xf32, #tpu.memory_space<vmem>>, vector<1x512xf32>
    %22 = vector.broadcast %21 : vector<1x512xf32> to vector<2x512xf32>
    %23 = arith.addf %20, %22 : vector<2x512xf32>
    %cst_25 = arith.constant 0.000000e+00 : f32
    %24 = vector.broadcast %cst_25 : f32 to vector<2x512xf32>
    %25 = arith.maximumf %23, %24 : vector<2x512xf32>
    %c0_26 = arith.constant 0 : index
    %c0_27 = arith.constant 0 : index
    %26 = vector.load %arg12[%c0_26, %c0_27] : memref<2x512xf32, #tpu.memory_space<vmem>>, vector<2x512xf32>
    tpu.vector_store %arg12[%c0_26, %c0_27], %25 {strides = array<i32>} : memref<2x512xf32, #tpu.memory_space<vmem>>, vector<2x512xf32>,
    return
  }
  func.func @transform_0(%arg0: i32) -> (i32, i32) {
    %c0_i32 = arith.constant 0 : i32
    %c0_i32_0 = arith.constant 0 : i32
    return %arg0, %c0_i32 : i32, i32
  }
  func.func @transform_1(%arg0: i32) -> (i32, i32) {
    %c0_i32 = arith.constant 0 : i32
    %c0_i32_0 = arith.constant 0 : i32
    return %arg0, %c0_i32 : i32, i32
  }
  func.func @transform_2(%arg0: i32) -> (i32, i32) {
    %c0_i32 = arith.constant 0 : i32
    %c0_i32_0 = arith.constant 0 : i32
    return %arg0, %c0_i32 : i32, i32
  }
  func.func @transform_3(%arg0: i32) -> (i32, i32) {
    %c0_i32 = arith.constant 0 : i32
    %c0_i32_0 = arith.constant 0 : i32
    %c0_i32_1 = arith.constant 0 : i32
    return %c0_i32, %c0_i32_0 : i32, i32
  }
  func.func @transform_4(%arg0: i32) -> (i32, i32) {
    %c0_i32 = arith.constant 0 : i32
    %c0_i32_0 = arith.constant 0 : i32
    %c0_i32_1 = arith.constant 0 : i32
    return %c0_i32, %c0_i32_0 : i32, i32
  }
  func.func @transform_5(%arg0: i32) -> (i32, i32) {
    %c0_i32 = arith.constant 0 : i32
    %c0_i32_0 = arith.constant 0 : i32
    %c0_i32_1 = arith.constant 0 : i32
    return %c0_i32, %c0_i32_0 : i32, i32
  }
  func.func @transform_6(%arg0: i32) -> (i32, i32) {
    %c0_i32 = arith.constant 0 : i32
    %c0_i32_0 = arith.constant 0 : i32
    %c0_i32_1 = arith.constant 0 : i32
    return %c0_i32, %c0_i32_0 : i32, i32
  }
  func.func @transform_7(%arg0: i32) -> (i32, i32) {
    %c0_i32 = arith.constant 0 : i32
    %c0_i32_0 = arith.constant 0 : i32
    %c0_i32_1 = arith.constant 0 : i32
    return %c0_i32, %c0_i32_0 : i32, i32
  }
  func.func @transform_8(%arg0: i32) -> (i32, i32) {
    %c0_i32 = arith.constant 0 : i32
    %c0_i32_0 = arith.constant 0 : i32
    %c0_i32_1 = arith.constant 0 : i32
    return %c0_i32, %c0_i32_0 : i32, i32
  }
  func.func @transform_9(%arg0: i32) -> (i32, i32) {
    %c0_i32 = arith.constant 0 : i32
    %c0_i32_0 = arith.constant 0 : i32
    return %arg0, %c0_i32 : i32, i32
  }
  func.func @transform_10(%arg0: i32) -> (i32, i32) {
    %c0_i32 = arith.constant 0 : i32
    %c0_i32_0 = arith.constant 0 : i32
    return %arg0, %c0_i32 : i32, i32
  }
  func.func @transform_11(%arg0: i32) -> (i32, i32) {
    %c0_i32 = arith.constant 0 : i32
    %c0_i32_0 = arith.constant 0 : i32
    return %arg0, %c0_i32 : i32, i32
  }
}

</mosaic_0001>

<llo_original>
// kernel: data_embedding2_forward.1
$region0: #{data_embedding2_forward.1}
  #allocation0 [shape = 'u32[]', space=smem, size = 0x4, offset = 0x4, fixed_abs, tag = 'smem constant byte address 0x4 - core index']
  #allocation1 [shape = 'u32[144,128]{1,0:T(1,128)}', space=vmem, size = 0x12000, scoped, tag = 'internal scratch']
  %s0 = inlined_call_operand.vmem [shape: f32[2,128], index: 0, kind: input, shape index: {}]
  %s1 = inlined_call_operand.vmem [shape: f32[2,128], index: 1, kind: input, shape index: {}]
  %s2 = inlined_call_operand.vmem [shape: f32[2,128], index: 2, kind: input, shape index: {}]
  %s3 = inlined_call_operand.vmem [shape: f32[128,512], index: 3, kind: input, shape index: {}]
  %s4 = inlined_call_operand.vmem [shape: f32[128,512], index: 4, kind: input, shape index: {}]
  %s5 = inlined_call_operand.hbm [shape: f32[128,512], index: 5, kind: input, shape index: {}]
  %s6 = inlined_call_operand.vmem [shape: f32[1,512], index: 6, kind: input, shape index: {}]
  %s7 = inlined_call_operand.vmem [shape: f32[1,512], index: 7, kind: input, shape index: {}]
  %s8 = inlined_call_operand.vmem [shape: f32[1,512], index: 8, kind: input, shape index: {}]
  %s9 = inlined_call_operand.vmem [shape: f32[2,512], index: 9, kind: output, shape index: {0}]
  %s10 = inlined_call_operand.vmem [shape: f32[2,512], index: 10, kind: output, shape index: {1}]
  %s11 = inlined_call_operand.vmem [shape: f32[2,512], index: 11, kind: output, shape index: {2}]
  %12 = xla_tuple %s9, %s10, %s11
  %s13 = sld [smem:[#allocation0]]
  $region66: #{data_embedding2_forward.1} parent=0
    _
  %s15 = ssub.s32 1, %s13
  %s16 = scalar_select 0, %s15, %s13
  $region1: #{data_embedding2_forward.1} parent=0
    #allocation2 [shape = 'u8[262144]{0}', space=vmem, size = 0x40000, scoped, tag = 'input window, operand 5, single buffered']
    #allocation3 [shape = 's32[1]{0}', space=sflag, size = 0x4, scoped, tag = 'scoped memory for data_embedding2_forward.1']
    %17 = vsyncpa [#allocation3], 0
    // Predicated region
    $region2: #{data_embedding2_forward.1} parent=1 // pred_check
      _
    $region3: #{data_embedding2_forward.1} parent=1 // pred_check_branch
      %19 = sbr.rel (0) target = $region5
    $region4: #{data_embedding2_forward.1} parent=1 // pred_region
      _
    $region5: #{data_embedding2_forward.1} parent=1 // pred_fallthru
      _
    // Predicated region
    $region6: #{data_embedding2_forward.1} parent=1 // pred_check
      _
    $region7: #{data_embedding2_forward.1} parent=1 // pred_check_branch
      %21 = sbr.rel (0) target = $region9
    $region8: #{data_embedding2_forward.1} parent=1 // pred_region
      _
    $region9: #{data_embedding2_forward.1} parent=1 // pred_fallthru
      _
    // Predicated region
    $region10: #{data_embedding2_forward.1} parent=1 // pred_check
      _
    $region11: #{data_embedding2_forward.1} parent=1 // pred_check_branch
      %23 = sbr.rel (0) target = $region13
    $region12: #{data_embedding2_forward.1} parent=1 // pred_region
      _
    $region13: #{data_embedding2_forward.1} parent=1 // pred_fallthru
      _
    // Predicated region
    $region14: #{data_embedding2_forward.1} parent=1 // pred_check
      _
    $region15: #{data_embedding2_forward.1} parent=1 // pred_check_branch
      %25 = sbr.rel (0) target = $region17
    $region16: #{data_embedding2_forward.1} parent=1 // pred_region
      _
    $region17: #{data_embedding2_forward.1} parent=1 // pred_fallthru
      _
    // Predicated region
    $region18: #{data_embedding2_forward.1} parent=1 // pred_check
      _
    $region19: #{data_embedding2_forward.1} parent=1 // pred_check_branch
      %27 = sbr.rel (0) target = $region21
    $region20: #{data_embedding2_forward.1} parent=1 // pred_region
      _
    $region21: #{data_embedding2_forward.1} parent=1 // pred_fallthru
      _
    // Predicated region
    $region22: #{data_embedding2_forward.1} parent=1 // pred_check
      _
    $region23: #{data_embedding2_forward.1} parent=1 // pred_check_branch
      %29 = sbr.rel (0) target = $region25
    $region24: #{data_embedding2_forward.1} parent=1 // pred_region
      %s31 = ssub.s32 8192, 8192
      %32 = vsyncadd [#allocation3], %s31
      %s33 = sshll.u32 [#allocation2], 4
      %s34 = int_to_ptr.vmem [resolvable:$true] %s33
      %39 = dma.hbm_to_vmem [thread:$0]  %s5, 8192, %s34, [#allocation3], 512, 512, 32
    $region25: #{data_embedding2_forward.1} parent=1 // pred_fallthru
      _
    // Predicated region
    $region26: #{data_embedding2_forward.1} parent=1 // pred_check
      _
    $region27: #{data_embedding2_forward.1} parent=1 // pred_check_branch
      %41 = sbr.rel (0) target = $region29
    $region28: #{data_embedding2_forward.1} parent=1 // pred_region
      _
    $region29: #{data_embedding2_forward.1} parent=1 // pred_fallthru
      _
    // Predicated region
    $region30: #{data_embedding2_forward.1} parent=1 // pred_check
      _
    $region31: #{data_embedding2_forward.1} parent=1 // pred_check_branch
      %43 = sbr.rel (0) target = $region33
    $region32: #{data_embedding2_forward.1} parent=1 // pred_region
      _
    $region33: #{data_embedding2_forward.1} parent=1 // pred_fallthru
      _
    // Predicated region
    $region34: #{data_embedding2_forward.1} parent=1 // pred_check
      _
    $region35: #{data_embedding2_forward.1} parent=1 // pred_check_branch
      %45 = sbr.rel (0) target = $region37
    $region36: #{data_embedding2_forward.1} parent=1 // pred_region
      _
    $region37: #{data_embedding2_forward.1} parent=1 // pred_fallthru
      _
    // Predicated region
    $region38: #{data_embedding2_forward.1} parent=1 // pred_check
      _
    $region39: #{data_embedding2_forward.1} parent=1 // pred_check_branch
      %47 = sbr.rel (0) target = $region41
    $region40: #{data_embedding2_forward.1} parent=1 // pred_region
      %48 = dma.done [#allocation3], 8192
    $region41: #{data_embedding2_forward.1} parent=1 // pred_fallthru
      _
    %v49 = vld [vmem:[%s0] sm:$0x3]
    %v50 = vld [vmem:[%s3] sm:$0xff]
    %v51 = vld [vmem:[%s3 + $0x8] sm:$0xff]
    %v52 = vld [vmem:[%s3 + $0x10] sm:$0xff]
    %v53 = vld [vmem:[%s3 + $0x18] sm:$0xff]
    %v54 = vld [vmem:[%s3 + $0x20] sm:$0xff]
    %v55 = vld [vmem:[%s3 + $0x28] sm:$0xff]
    %v56 = vld [vmem:[%s3 + $0x30] sm:$0xff]
    %v57 = vld [vmem:[%s3 + $0x38] sm:$0xff]
    %v58 = vld [vmem:[%s3 + $0x40] sm:$0xff]
    %v59 = vld [vmem:[%s3 + $0x48] sm:$0xff]
    %v60 = vld [vmem:[%s3 + $0x50] sm:$0xff]
    %v61 = vld [vmem:[%s3 + $0x58] sm:$0xff]
    %v62 = vld [vmem:[%s3 + $0x60] sm:$0xff]
    %v63 = vld [vmem:[%s3 + $0x68] sm:$0xff]
    %v64 = vld [vmem:[%s3 + $0x70] sm:$0xff]
    %v65 = vld [vmem:[%s3 + $0x78] sm:$0xff]
    %v66 = vld [vmem:[%s3 + $0x80] sm:$0xff]
    %v67 = vld [vmem:[%s3 + $0x88] sm:$0xff]
    %v68 = vld [vmem:[%s3 + $0x90] sm:$0xff]
    %v69 = vld [vmem:[%s3 + $0x98] sm:$0xff]
    %v70 = vld [vmem:[%s3 + $0xa0] sm:$0xff]
    %v71 = vld [vmem:[%s3 + $0xa8] sm:$0xff]
    %v72 = vld [vmem:[%s3 + $0xb0] sm:$0xff]
    %v73 = vld [vmem:[%s3 + $0xb8] sm:$0xff]
    %v74 = vld [vmem:[%s3 + $0xc0] sm:$0xff]
    %v75 = vld [vmem:[%s3 + $0xc8] sm:$0xff]
    %v76 = vld [vmem:[%s3 + $0xd0] sm:$0xff]
    %v77 = vld [vmem:[%s3 + $0xd8] sm:$0xff]
    %v78 = vld [vmem:[%s3 + $0xe0] sm:$0xff]
    %v79 = vld [vmem:[%s3 + $0xe8] sm:$0xff]
    %v80 = vld [vmem:[%s3 + $0xf0] sm:$0xff]
    %v81 = vld [vmem:[%s3 + $0xf8] sm:$0xff]
    %v82 = vld [vmem:[%s3 + $0x100] sm:$0xff]
    %v83 = vld [vmem:[%s3 + $0x108] sm:$0xff]
    %v84 = vld [vmem:[%s3 + $0x110] sm:$0xff]
    %v85 = vld [vmem:[%s3 + $0x118] sm:$0xff]
    %v86 = vld [vmem:[%s3 + $0x120] sm:$0xff]
    %v87 = vld [vmem:[%s3 + $0x128] sm:$0xff]
    %v88 = vld [vmem:[%s3 + $0x130] sm:$0xff]
    %v89 = vld [vmem:[%s3 + $0x138] sm:$0xff]
    %v90 = vld [vmem:[%s3 + $0x140] sm:$0xff]
    %v91 = vld [vmem:[%s3 + $0x148] sm:$0xff]
    %v92 = vld [vmem:[%s3 + $0x150] sm:$0xff]
    %v93 = vld [vmem:[%s3 + $0x158] sm:$0xff]
    %v94 = vld [vmem:[%s3 + $0x160] sm:$0xff]
    %v95 = vld [vmem:[%s3 + $0x168] sm:$0xff]
    %v96 = vld [vmem:[%s3 + $0x170] sm:$0xff]
    %v97 = vld [vmem:[%s3 + $0x178] sm:$0xff]
    %v98 = vld [vmem:[%s3 + $0x180] sm:$0xff]
    %v99 = vld [vmem:[%s3 + $0x188] sm:$0xff]
    %v100 = vld [vmem:[%s3 + $0x190] sm:$0xff]
    %v101 = vld [vmem:[%s3 + $0x198] sm:$0xff]
    %v102 = vld [vmem:[%s3 + $0x1a0] sm:$0xff]
    %v103 = vld [vmem:[%s3 + $0x1a8] sm:$0xff]
    %v104 = vld [vmem:[%s3 + $0x1b0] sm:$0xff]
    %v105 = vld [vmem:[%s3 + $0x1b8] sm:$0xff]
    %v106 = vld [vmem:[%s3 + $0x1c0] sm:$0xff]
    %v107 = vld [vmem:[%s3 + $0x1c8] sm:$0xff]
    %v108 = vld [vmem:[%s3 + $0x1d0] sm:$0xff]
    %v109 = vld [vmem:[%s3 + $0x1d8] sm:$0xff]
    %v110 = vld [vmem:[%s3 + $0x1e0] sm:$0xff]
    %v111 = vld [vmem:[%s3 + $0x1e8] sm:$0xff]
    %v112 = vld [vmem:[%s3 + $0x1f0] sm:$0xff]
    %v113 = vld [vmem:[%s3 + $0x1f8] sm:$0xff]
    %v114 = vld [vmem:[%s6] sm:$0xf]
    %v116 = vlaneseq
    %v117 = vshrl.u32 %v116, 7
    %v118 = vsub.s32 0, %v117
    %v119 = vrot.slane %v114, %v118
    %v120 = vlaneseq
    %v121 = vshrl.u32 %v120, 7
    %v122 = vsub.s32 1, %v121
    %v123 = vrot.slane %v114, %v122
    %v124 = vlaneseq
    %v125 = vshrl.u32 %v124, 7
    %v126 = vsub.s32 2, %v125
    %v127 = vrot.slane %v114, %v126
    %v128 = vlaneseq
    %v129 = vshrl.u32 %v128, 7
    %v130 = vsub.s32 3, %v129
    %v131 = vrot.slane %v114, %v130
    %136 = vmatprep.subr.mxu0 %v51
    %137 = vmatpush1.msra.mxu0 %v50
    %138 = vmatprep.subr.mxu0 %v55
    %139 = vmatpush1.msra.mxu0 %v54
    %140 = vmatprep.subr.mxu0 %v59
    %141 = vmatpush1.msra.mxu0 %v58
    %142 = vmatprep.subr.mxu0 %v63
    %143 = vmatpush1.msra.mxu0 %v62
    %144 = vmatprep.subr.mxu0 %v67
    %145 = vmatpush1.msra.mxu0 %v66
    %146 = vmatprep.subr.mxu0 %v71
    %147 = vmatpush1.msra.mxu0 %v70
    %148 = vmatprep.subr.mxu0 %v75
    %149 = vmatpush1.msra.mxu0 %v74
    %150 = vmatprep.subr.mxu0 %v79
    %151 = vmatpush1.msra.mxu0 %v78
    %152 = vmatprep.subr.mxu0 %v83
    %153 = vmatpush1.msra.mxu0 %v82
    %154 = vmatprep.subr.mxu0 %v87
    %155 = vmatpush1.msra.mxu0 %v86
    %156 = vmatprep.subr.mxu0 %v91
    %157 = vmatpush1.msra.mxu0 %v90
    %158 = vmatprep.subr.mxu0 %v95
    %159 = vmatpush1.msra.mxu0 %v94
    %160 = vmatprep.subr.mxu0 %v99
    %161 = vmatpush1.msra.mxu0 %v98
    %162 = vmatprep.subr.mxu0 %v103
    %163 = vmatpush1.msra.mxu0 %v102
    %164 = vmatprep.subr.mxu0 %v107
    %165 = vmatpush1.msra.mxu0 %v106
    %166 = vmatprep.subr.mxu0 %v111
    %167 = vmatpush1.msra.mxu0 %v110
    %168 = vmatprep.subr.mxu0 0.0
    %169 = vmatpush1.msra.mxu0 0.0
    %170 = vmatprep.subr.mxu0 0.0
    %171 = vmatpush1.msra.mxu0 0.0
    %172 = vmatprep.subr.mxu0 0.0
    %173 = vmatpush1.msra.mxu0 0.0
    %174 = vmatprep.subr.mxu0 0.0
    %175 = vmatpush1.msra.mxu0 0.0
    %176 = vmatprep.subr.mxu0 0.0
    %177 = vmatpush1.msra.mxu0 0.0
    %178 = vmatprep.subr.mxu0 0.0
    %179 = vmatpush1.msra.mxu0 0.0
    %180 = vmatprep.subr.mxu0 0.0
    %181 = vmatpush1.msra.mxu0 0.0
    %182 = vmatprep.subr.mxu0 0.0
    %183 = vmatpush1.msra.mxu0 0.0
    %184 = vmatprep.subr.mxu0 0.0
    %185 = vmatpush1.msra.mxu0 0.0
    %186 = vmatprep.subr.mxu0 0.0
    %187 = vmatpush1.msra.mxu0 0.0
    %188 = vmatprep.subr.mxu0 0.0
    %189 = vmatpush1.msra.mxu0 0.0
    %190 = vmatprep.subr.mxu0 0.0
    %191 = vmatpush1.msra.mxu0 0.0
    %192 = vmatprep.subr.mxu0 0.0
    %193 = vmatpush1.msra.mxu0 0.0
    %194 = vmatprep.subr.mxu0 0.0
    %195 = vmatpush1.msra.mxu0 0.0
    %196 = vmatprep.subr.mxu0 0.0
    %197 = vmatpush1.msra.mxu0 0.0
    %198 = vmatprep.subr.mxu0 0.0
    %199 = vmatpush1.msra.mxu0 0.0
    %200 = vmatprep.mubr.f32.mxu0 0.0
    %201 = vmatmul.mubr.f32.gmra.mrb[0].mxu0 %v49
    %v202 = vpop.f32.mrb[0].mxu0
    %v203 = vadd.f32 %v119, %v202
    %v204 = vpop.f32.mrb[0].mxu0
    %v205 = vadd.f32 %v123, %v204
    %206 = vdwg.mxu0
    %207 = vmatprep.subr.mxu0 %v53
    %208 = vmatpush1.msra.mxu0 %v52
    %209 = vmatprep.subr.mxu0 %v57
    %210 = vmatpush1.msra.mxu0 %v56
    %211 = vmatprep.subr.mxu0 %v61
    %212 = vmatpush1.msra.mxu0 %v60
    %213 = vmatprep.subr.mxu0 %v65
    %214 = vmatpush1.msra.mxu0 %v64
    %215 = vmatprep.subr.mxu0 %v69
    %216 = vmatpush1.msra.mxu0 %v68
    %217 = vmatprep.subr.mxu0 %v73
    %218 = vmatpush1.msra.mxu0 %v72
    %219 = vmatprep.subr.mxu0 %v77
    %220 = vmatpush1.msra.mxu0 %v76
    %221 = vmatprep.subr.mxu0 %v81
    %222 = vmatpush1.msra.mxu0 %v80
    %223 = vmatprep.subr.mxu0 %v85
    %224 = vmatpush1.msra.mxu0 %v84
    %225 = vmatprep.subr.mxu0 %v89
    %226 = vmatpush1.msra.mxu0 %v88
    %227 = vmatprep.subr.mxu0 %v93
    %228 = vmatpush1.msra.mxu0 %v92
    %229 = vmatprep.subr.mxu0 %v97
    %230 = vmatpush1.msra.mxu0 %v96
    %231 = vmatprep.subr.mxu0 %v101
    %232 = vmatpush1.msra.mxu0 %v100
    %233 = vmatprep.subr.mxu0 %v105
    %234 = vmatpush1.msra.mxu0 %v104
    %235 = vmatprep.subr.mxu0 %v109
    %236 = vmatpush1.msra.mxu0 %v108
    %237 = vmatprep.subr.mxu0 %v113
    %238 = vmatpush1.msra.mxu0 %v112
    %239 = vmatprep.subr.mxu0 0.0
    %240 = vmatpush1.msra.mxu0 0.0
    %241 = vmatprep.subr.mxu0 0.0
    %242 = vmatpush1.msra.mxu0 0.0
    %243 = vmatprep.subr.mxu0 0.0
    %244 = vmatpush1.msra.mxu0 0.0
    %245 = vmatprep.subr.mxu0 0.0
    %246 = vmatpush1.msra.mxu0 0.0
    %247 = vmatprep.subr.mxu0 0.0
    %248 = vmatpush1.msra.mxu0 0.0
    %249 = vmatprep.subr.mxu0 0.0
    %250 = vmatpush1.msra.mxu0 0.0
    %251 = vmatprep.subr.mxu0 0.0
    %252 = vmatpush1.msra.mxu0 0.0
    %253 = vmatprep.subr.mxu0 0.0
    %254 = vmatpush1.msra.mxu0 0.0
    %255 = vmatprep.subr.mxu0 0.0
    %256 = vmatpush1.msra.mxu0 0.0
    %257 = vmatprep.subr.mxu0 0.0
    %258 = vmatpush1.msra.mxu0 0.0
    %259 = vmatprep.subr.mxu0 0.0
    %260 = vmatpush1.msra.mxu0 0.0
    %261 = vmatprep.subr.mxu0 0.0
    %262 = vmatpush1.msra.mxu0 0.0
    %263 = vmatprep.subr.mxu0 0.0
    %264 = vmatpush1.msra.mxu0 0.0
    %265 = vmatprep.subr.mxu0 0.0
    %266 = vmatpush1.msra.mxu0 0.0
    %267 = vmatprep.subr.mxu0 0.0
    %268 = vmatpush1.msra.mxu0 0.0
    %269 = vmatprep.subr.mxu0 0.0
    %270 = vmatpush1.msra.mxu0 0.0
    %271 = vmatprep.mubr.f32.mxu0 0.0
    %272 = vmatmul.mubr.f32.gmra.mrb[0].mxu0 %v49
    %v273 = vpop.f32.mrb[0].mxu0
    %v274 = vadd.f32 %v127, %v273
    %v275 = vpop.f32.mrb[0].mxu0
    %v276 = vadd.f32 %v131, %v275
    %277 = vdwg.mxu0
    %v278 = vmax.f32 %v203, 0.0
    %v279 = vmax.f32 %v205, 0.0
    %v280 = vmax.f32 %v274, 0.0
    %v281 = vmax.f32 %v276, 0.0
    %v286 = vcombine.low %v278, %v279
    %v287 = vcombine.low %v280, %v281
    %v289 = vunpack.c.l.s4 1983009808
    %v290 = vunpack.c.0.s8 %v289
    %v291 = vlaneseq
    %v292 = vshrl.u32 %v291, 7
    %v293 = vsub.s32 %v290, %v292
    %v294 = vrot.slane %v286, %v293
    %v296 = vunpack.c.l.s4 1983009808
    %v297 = vunpack.c.0.s8 %v296
    %v298 = vlaneseq
    %v299 = vshrl.u32 %v298, 7
    %v300 = vsub.s32 %v297, %v299
    %v301 = vrot.slane %v287, %v300
    %v302 = vcombine.low %v294, %v301
    %304 = vst [vmem:[%s9] sm:$0xff] %v302
    %v305 = vld [vmem:[%s1] sm:$0x3]
    %v306 = vld [vmem:[%s4] sm:$0xff]
    %v307 = vld [vmem:[%s4 + $0x8] sm:$0xff]
    %v308 = vld [vmem:[%s4 + $0x10] sm:$0xff]
    %v309 = vld [vmem:[%s4 + $0x18] sm:$0xff]
    %v310 = vld [vmem:[%s4 + $0x20] sm:$0xff]
    %v311 = vld [vmem:[%s4 + $0x28] sm:$0xff]
    %v312 = vld [vmem:[%s4 + $0x30] sm:$0xff]
    %v313 = vld [vmem:[%s4 + $0x38] sm:$0xff]
    %v314 = vld [vmem:[%s4 + $0x40] sm:$0xff]
    %v315 = vld [vmem:[%s4 + $0x48] sm:$0xff]
    %v316 = vld [vmem:[%s4 + $0x50] sm:$0xff]
    %v317 = vld [vmem:[%s4 + $0x58] sm:$0xff]
    %v318 = vld [vmem:[%s4 + $0x60] sm:$0xff]
    %v319 = vld [vmem:[%s4 + $0x68] sm:$0xff]
    %v320 = vld [vmem:[%s4 + $0x70] sm:$0xff]
    %v321 = vld [vmem:[%s4 + $0x78] sm:$0xff]
    %v322 = vld [vmem:[%s4 + $0x80] sm:$0xff]
    %v323 = vld [vmem:[%s4 + $0x88] sm:$0xff]
    %v324 = vld [vmem:[%s4 + $0x90] sm:$0xff]
    %v325 = vld [vmem:[%s4 + $0x98] sm:$0xff]
    %v326 = vld [vmem:[%s4 + $0xa0] sm:$0xff]
    %v327 = vld [vmem:[%s4 + $0xa8] sm:$0xff]
    %v328 = vld [vmem:[%s4 + $0xb0] sm:$0xff]
    %v329 = vld [vmem:[%s4 + $0xb8] sm:$0xff]
    %v330 = vld [vmem:[%s4 + $0xc0] sm:$0xff]
    %v331 = vld [vmem:[%s4 + $0xc8] sm:$0xff]
    %v332 = vld [vmem:[%s4 + $0xd0] sm:$0xff]
    %v333 = vld [vmem:[%s4 + $0xd8] sm:$0xff]
    %v334 = vld [vmem:[%s4 + $0xe0] sm:$0xff]
    %v335 = vld [vmem:[%s4 + $0xe8] sm:$0xff]
    %v336 = vld [vmem:[%s4 + $0xf0] sm:$0xff]
    %v337 = vld [vmem:[%s4 + $0xf8] sm:$0xff]
    %v338 = vld [vmem:[%s4 + $0x100] sm:$0xff]
    %v339 = vld [vmem:[%s4 + $0x108] sm:$0xff]
    %v340 = vld [vmem:[%s4 + $0x110] sm:$0xff]
    %v341 = vld [vmem:[%s4 + $0x118] sm:$0xff]
    %v342 = vld [vmem:[%s4 + $0x120] sm:$0xff]
    %v343 = vld [vmem:[%s4 + $0x128] sm:$0xff]
    %v344 = vld [vmem:[%s4 + $0x130] sm:$0xff]
    %v345 = vld [vmem:[%s4 + $0x138] sm:$0xff]
    %v346 = vld [vmem:[%s4 + $0x140] sm:$0xff]
    %v347 = vld [vmem:[%s4 + $0x148] sm:$0xff]
    %v348 = vld [vmem:[%s4 + $0x150] sm:$0xff]
    %v349 = vld [vmem:[%s4 + $0x158] sm:$0xff]
    %v350 = vld [vmem:[%s4 + $0x160] sm:$0xff]
    %v351 = vld [vmem:[%s4 + $0x168] sm:$0xff]
    %v352 = vld [vmem:[%s4 + $0x170] sm:$0xff]
    %v353 = vld [vmem:[%s4 + $0x178] sm:$0xff]
    %v354 = vld [vmem:[%s4 + $0x180] sm:$0xff]
    %v355 = vld [vmem:[%s4 + $0x188] sm:$0xff]
    %v356 = vld [vmem:[%s4 + $0x190] sm:$0xff]
    %v357 = vld [vmem:[%s4 + $0x198] sm:$0xff]
    %v358 = vld [vmem:[%s4 + $0x1a0] sm:$0xff]
    %v359 = vld [vmem:[%s4 + $0x1a8] sm:$0xff]
    %v360 = vld [vmem:[%s4 + $0x1b0] sm:$0xff]
    %v361 = vld [vmem:[%s4 + $0x1b8] sm:$0xff]
    %v362 = vld [vmem:[%s4 + $0x1c0] sm:$0xff]
    %v363 = vld [vmem:[%s4 + $0x1c8] sm:$0xff]
    %v364 = vld [vmem:[%s4 + $0x1d0] sm:$0xff]
    %v365 = vld [vmem:[%s4 + $0x1d8] sm:$0xff]
    %v366 = vld [vmem:[%s4 + $0x1e0] sm:$0xff]
    %v367 = vld [vmem:[%s4 + $0x1e8] sm:$0xff]
    %v368 = vld [vmem:[%s4 + $0x1f0] sm:$0xff]
    %v369 = vld [vmem:[%s4 + $0x1f8] sm:$0xff]
    %v370 = vld [vmem:[%s7] sm:$0xf]
    %v372 = vlaneseq
    %v373 = vshrl.u32 %v372, 7
    %v374 = vsub.s32 0, %v373
    %v375 = vrot.slane %v370, %v374
    %v376 = vlaneseq
    %v377 = vshrl.u32 %v376, 7
    %v378 = vsub.s32 1, %v377
    %v379 = vrot.slane %v370, %v378
    %v380 = vlaneseq
    %v381 = vshrl.u32 %v380, 7
    %v382 = vsub.s32 2, %v381
    %v383 = vrot.slane %v370, %v382
    %v384 = vlaneseq
    %v385 = vshrl.u32 %v384, 7
    %v386 = vsub.s32 3, %v385
    %v387 = vrot.slane %v370, %v386
    %392 = vmatprep.subr.mxu0 %v307
    %393 = vmatpush1.msra.mxu0 %v306
    %394 = vmatprep.subr.mxu0 %v311
    %395 = vmatpush1.msra.mxu0 %v310
    %396 = vmatprep.subr.mxu0 %v315
    %397 = vmatpush1.msra.mxu0 %v314
    %398 = vmatprep.subr.mxu0 %v319
    %399 = vmatpush1.msra.mxu0 %v318
    %400 = vmatprep.subr.mxu0 %v323
    %401 = vmatpush1.msra.mxu0 %v322
    %402 = vmatprep.subr.mxu0 %v327
    %403 = vmatpush1.msra.mxu0 %v326
    %404 = vmatprep.subr.mxu0 %v331
    %405 = vmatpush1.msra.mxu0 %v330
    %406 = vmatprep.subr.mxu0 %v335
    %407 = vmatpush1.msra.mxu0 %v334
    %408 = vmatprep.subr.mxu0 %v339
    %409 = vmatpush1.msra.mxu0 %v338
    %410 = vmatprep.subr.mxu0 %v343
    %411 = vmatpush1.msra.mxu0 %v342
    %412 = vmatprep.subr.mxu0 %v347
    %413 = vmatpush1.msra.mxu0 %v346
    %414 = vmatprep.subr.mxu0 %v351
    %415 = vmatpush1.msra.mxu0 %v350
    %416 = vmatprep.subr.mxu0 %v355
    %417 = vmatpush1.msra.mxu0 %v354
    %418 = vmatprep.subr.mxu0 %v359
    %419 = vmatpush1.msra.mxu0 %v358
    %420 = vmatprep.subr.mxu0 %v363
    %421 = vmatpush1.msra.mxu0 %v362
    %422 = vmatprep.subr.mxu0 %v367
    %423 = vmatpush1.msra.mxu0 %v366
    %424 = vmatprep.subr.mxu0 0.0
    %425 = vmatpush1.msra.mxu0 0.0
    %426 = vmatprep.subr.mxu0 0.0
    %427 = vmatpush1.msra.mxu0 0.0
    %428 = vmatprep.subr.mxu0 0.0
    %429 = vmatpush1.msra.mxu0 0.0
    %430 = vmatprep.subr.mxu0 0.0
    %431 = vmatpush1.msra.mxu0 0.0
    %432 = vmatprep.subr.mxu0 0.0
    %433 = vmatpush1.msra.mxu0 0.0
    %434 = vmatprep.subr.mxu0 0.0
    %435 = vmatpush1.msra.mxu0 0.0
    %436 = vmatprep.subr.mxu0 0.0
    %437 = vmatpush1.msra.mxu0 0.0
    %438 = vmatprep.subr.mxu0 0.0
    %439 = vmatpush1.msra.mxu0 0.0
    %440 = vmatprep.subr.mxu0 0.0
    %441 = vmatpush1.msra.mxu0 0.0
    %442 = vmatprep.subr.mxu0 0.0
    %443 = vmatpush1.msra.mxu0 0.0
    %444 = vmatprep.subr.mxu0 0.0
    %445 = vmatpush1.msra.mxu0 0.0
    %446 = vmatprep.subr.mxu0 0.0
    %447 = vmatpush1.msra.mxu0 0.0
    %448 = vmatprep.subr.mxu0 0.0
    %449 = vmatpush1.msra.mxu0 0.0
    %450 = vmatprep.subr.mxu0 0.0
    %451 = vmatpush1.msra.mxu0 0.0
    %452 = vmatprep.subr.mxu0 0.0
    %453 = vmatpush1.msra.mxu0 0.0
    %454 = vmatprep.subr.mxu0 0.0
    %455 = vmatpush1.msra.mxu0 0.0
    %456 = vmatprep.mubr.f32.mxu0 0.0
    %457 = vmatmul.mubr.f32.gmra.mrb[0].mxu0 %v305
    %v458 = vpop.f32.mrb[0].mxu0
    %v459 = vadd.f32 %v375, %v458
    %v460 = vpop.f32.mrb[0].mxu0
    %v461 = vadd.f32 %v379, %v460
    %462 = vdwg.mxu0
    %463 = vmatprep.subr.mxu0 %v309
    %464 = vmatpush1.msra.mxu0 %v308
    %465 = vmatprep.subr.mxu0 %v313
    %466 = vmatpush1.msra.mxu0 %v312
    %467 = vmatprep.subr.mxu0 %v317
    %468 = vmatpush1.msra.mxu0 %v316
    %469 = vmatprep.subr.mxu0 %v321
    %470 = vmatpush1.msra.mxu0 %v320
    %471 = vmatprep.subr.mxu0 %v325
    %472 = vmatpush1.msra.mxu0 %v324
    %473 = vmatprep.subr.mxu0 %v329
    %474 = vmatpush1.msra.mxu0 %v328
    %475 = vmatprep.subr.mxu0 %v333
    %476 = vmatpush1.msra.mxu0 %v332
    %477 = vmatprep.subr.mxu0 %v337
    %478 = vmatpush1.msra.mxu0 %v336
    %479 = vmatprep.subr.mxu0 %v341
    %480 = vmatpush1.msra.mxu0 %v340
    %481 = vmatprep.subr.mxu0 %v345
    %482 = vmatpush1.msra.mxu0 %v344
    %483 = vmatprep.subr.mxu0 %v349
    %484 = vmatpush1.msra.mxu0 %v348
    %485 = vmatprep.subr.mxu0 %v353
    %486 = vmatpush1.msra.mxu0 %v352
    %487 = vmatprep.subr.mxu0 %v357
    %488 = vmatpush1.msra.mxu0 %v356
    %489 = vmatprep.subr.mxu0 %v361
    %490 = vmatpush1.msra.mxu0 %v360
    %491 = vmatprep.subr.mxu0 %v365
    %492 = vmatpush1.msra.mxu0 %v364
    %493 = vmatprep.subr.mxu0 %v369
    %494 = vmatpush1.msra.mxu0 %v368
    %495 = vmatprep.subr.mxu0 0.0
    %496 = vmatpush1.msra.mxu0 0.0
    %497 = vmatprep.subr.mxu0 0.0
    %498 = vmatpush1.msra.mxu0 0.0
    %499 = vmatprep.subr.mxu0 0.0
    %500 = vmatpush1.msra.mxu0 0.0
    %501 = vmatprep.subr.mxu0 0.0
    %502 = vmatpush1.msra.mxu0 0.0
    %503 = vmatprep.subr.mxu0 0.0
    %504 = vmatpush1.msra.mxu0 0.0
    %505 = vmatprep.subr.mxu0 0.0
    %506 = vmatpush1.msra.mxu0 0.0
    %507 = vmatprep.subr.mxu0 0.0
    %508 = vmatpush1.msra.mxu0 0.0
    %509 = vmatprep.subr.mxu0 0.0
    %510 = vmatpush1.msra.mxu0 0.0
    %511 = vmatprep.subr.mxu0 0.0
    %512 = vmatpush1.msra.mxu0 0.0
    %513 = vmatprep.subr.mxu0 0.0
    %514 = vmatpush1.msra.mxu0 0.0
    %515 = vmatprep.subr.mxu0 0.0
    %516 = vmatpush1.msra.mxu0 0.0
    %517 = vmatprep.subr.mxu0 0.0
    %518 = vmatpush1.msra.mxu0 0.0
    %519 = vmatprep.subr.mxu0 0.0
    %520 = vmatpush1.msra.mxu0 0.0
    %521 = vmatprep.subr.mxu0 0.0
    %522 = vmatpush1.msra.mxu0 0.0
    %523 = vmatprep.subr.mxu0 0.0
    %524 = vmatpush1.msra.mxu0 0.0
    %525 = vmatprep.subr.mxu0 0.0
    %526 = vmatpush1.msra.mxu0 0.0
    %527 = vmatprep.mubr.f32.mxu0 0.0
    %528 = vmatmul.mubr.f32.gmra.mrb[0].mxu0 %v305
    %v529 = vpop.f32.mrb[0].mxu0
    %v530 = vadd.f32 %v383, %v529
    %v531 = vpop.f32.mrb[0].mxu0
    %v532 = vadd.f32 %v387, %v531
    %533 = vdwg.mxu0
    %v534 = vmax.f32 %v459, 0.0
    %v535 = vmax.f32 %v461, 0.0
    %v536 = vmax.f32 %v530, 0.0
    %v537 = vmax.f32 %v532, 0.0
    %v542 = vcombine.low %v534, %v535
    %v543 = vcombine.low %v536, %v537
    %v545 = vunpack.c.l.s4 1983009808
    %v546 = vunpack.c.0.s8 %v545
    %v547 = vlaneseq
    %v548 = vshrl.u32 %v547, 7
    %v549 = vsub.s32 %v546, %v548
    %v550 = vrot.slane %v542, %v549
    %v552 = vunpack.c.l.s4 1983009808
    %v553 = vunpack.c.0.s8 %v552
    %v554 = vlaneseq
    %v555 = vshrl.u32 %v554, 7
    %v556 = vsub.s32 %v553, %v555
    %v557 = vrot.slane %v543, %v556
    %v558 = vcombine.low %v550, %v557
    %560 = vst [vmem:[%s10] sm:$0xff] %v558
    %v561 = vld [vmem:[%s2] sm:$0x3]
    %v562 = vld [vmem:[#allocation2] sm:$0xff]
    %v563 = vld [vmem:[#allocation2 + $0x8] sm:$0xff]
    %v564 = vld [vmem:[#allocation2 + $0x10] sm:$0xff]
    %v565 = vld [vmem:[#allocation2 + $0x18] sm:$0xff]
    %v566 = vld [vmem:[#allocation2 + $0x20] sm:$0xff]
    %v567 = vld [vmem:[#allocation2 + $0x28] sm:$0xff]
    %v568 = vld [vmem:[#allocation2 + $0x30] sm:$0xff]
    %v569 = vld [vmem:[#allocation2 + $0x38] sm:$0xff]
    %v570 = vld [vmem:[#allocation2 + $0x40] sm:$0xff]
    %v571 = vld [vmem:[#allocation2 + $0x48] sm:$0xff]
    %v572 = vld [vmem:[#allocation2 + $0x50] sm:$0xff]
    %v573 = vld [vmem:[#allocation2 + $0x58] sm:$0xff]
    %v574 = vld [vmem:[#allocation2 + $0x60] sm:$0xff]
    %v575 = vld [vmem:[#allocation2 + $0x68] sm:$0xff]
    %v576 = vld [vmem:[#allocation2 + $0x70] sm:$0xff]
    %v577 = vld [vmem:[#allocation2 + $0x78] sm:$0xff]
    %v578 = vld [vmem:[#allocation2 + $0x80] sm:$0xff]
    %v579 = vld [vmem:[#allocation2 + $0x88] sm:$0xff]
    %v580 = vld [vmem:[#allocation2 + $0x90] sm:$0xff]
    %v581 = vld [vmem:[#allocation2 + $0x98] sm:$0xff]
    %v582 = vld [vmem:[#allocation2 + $0xa0] sm:$0xff]
    %v583 = vld [vmem:[#allocation2 + $0xa8] sm:$0xff]
    %v584 = vld [vmem:[#allocation2 + $0xb0] sm:$0xff]
    %v585 = vld [vmem:[#allocation2 + $0xb8] sm:$0xff]
    %v586 = vld [vmem:[#allocation2 + $0xc0] sm:$0xff]
    %v587 = vld [vmem:[#allocation2 + $0xc8] sm:$0xff]
    %v588 = vld [vmem:[#allocation2 + $0xd0] sm:$0xff]
    %v589 = vld [vmem:[#allocation2 + $0xd8] sm:$0xff]
    %v590 = vld [vmem:[#allocation2 + $0xe0] sm:$0xff]
    %v591 = vld [vmem:[#allocation2 + $0xe8] sm:$0xff]
    %v592 = vld [vmem:[#allocation2 + $0xf0] sm:$0xff]
    %v593 = vld [vmem:[#allocation2 + $0xf8] sm:$0xff]
    %v594 = vld [vmem:[#allocation2 + $0x100] sm:$0xff]
    %v595 = vld [vmem:[#allocation2 + $0x108] sm:$0xff]
    %v596 = vld [vmem:[#allocation2 + $0x110] sm:$0xff]
    %v597 = vld [vmem:[#allocation2 + $0x118] sm:$0xff]
    %v598 = vld [vmem:[#allocation2 + $0x120] sm:$0xff]
    %v599 = vld [vmem:[#allocation2 + $0x128] sm:$0xff]
    %v600 = vld [vmem:[#allocation2 + $0x130] sm:$0xff]
    %v601 = vld [vmem:[#allocation2 + $0x138] sm:$0xff]
    %v602 = vld [vmem:[#allocation2 + $0x140] sm:$0xff]
    %v603 = vld [vmem:[#allocation2 + $0x148] sm:$0xff]
    %v604 = vld [vmem:[#allocation2 + $0x150] sm:$0xff]
    %v605 = vld [vmem:[#allocation2 + $0x158] sm:$0xff]
    %v606 = vld [vmem:[#allocation2 + $0x160] sm:$0xff]
    %v607 = vld [vmem:[#allocation2 + $0x168] sm:$0xff]
    %v608 = vld [vmem:[#allocation2 + $0x170] sm:$0xff]
    %v609 = vld [vmem:[#allocation2 + $0x178] sm:$0xff]
    %v610 = vld [vmem:[#allocation2 + $0x180] sm:$0xff]
    %v611 = vld [vmem:[#allocation2 + $0x188] sm:$0xff]
    %v612 = vld [vmem:[#allocation2 + $0x190] sm:$0xff]
    %v613 = vld [vmem:[#allocation2 + $0x198] sm:$0xff]
    %v614 = vld [vmem:[#allocation2 + $0x1a0] sm:$0xff]
    %v615 = vld [vmem:[#allocation2 + $0x1a8] sm:$0xff]
    %v616 = vld [vmem:[#allocation2 + $0x1b0] sm:$0xff]
    %v617 = vld [vmem:[#allocation2 + $0x1b8] sm:$0xff]
    %v618 = vld [vmem:[#allocation2 + $0x1c0] sm:$0xff]
    %v619 = vld [vmem:[#allocation2 + $0x1c8] sm:$0xff]
    %v620 = vld [vmem:[#allocation2 + $0x1d0] sm:$0xff]
    %v621 = vld [vmem:[#allocation2 + $0x1d8] sm:$0xff]
    %v622 = vld [vmem:[#allocation2 + $0x1e0] sm:$0xff]
    %v623 = vld [vmem:[#allocation2 + $0x1e8] sm:$0xff]
    %v624 = vld [vmem:[#allocation2 + $0x1f0] sm:$0xff]
    %v625 = vld [vmem:[#allocation2 + $0x1f8] sm:$0xff]
    %v626 = vld [vmem:[%s8] sm:$0xf]
    %v628 = vlaneseq
    %v629 = vshrl.u32 %v628, 7
    %v630 = vsub.s32 0, %v629
    %v631 = vrot.slane %v626, %v630
    %v632 = vlaneseq
    %v633 = vshrl.u32 %v632, 7
    %v634 = vsub.s32 1, %v633
    %v635 = vrot.slane %v626, %v634
    %v636 = vlaneseq
    %v637 = vshrl.u32 %v636, 7
    %v638 = vsub.s32 2, %v637
    %v639 = vrot.slane %v626, %v638
    %v640 = vlaneseq
    %v641 = vshrl.u32 %v640, 7
    %v642 = vsub.s32 3, %v641
    %v643 = vrot.slane %v626, %v642
    %648 = vmatprep.subr.mxu0 %v563
    %649 = vmatpush1.msra.mxu0 %v562
    %650 = vmatprep.subr.mxu0 %v567
    %651 = vmatpush1.msra.mxu0 %v566
    %652 = vmatprep.subr.mxu0 %v571
    %653 = vmatpush1.msra.mxu0 %v570
    %654 = vmatprep.subr.mxu0 %v575
    %655 = vmatpush1.msra.mxu0 %v574
    %656 = vmatprep.subr.mxu0 %v579
    %657 = vmatpush1.msra.mxu0 %v578
    %658 = vmatprep.subr.mxu0 %v583
    %659 = vmatpush1.msra.mxu0 %v582
    %660 = vmatprep.subr.mxu0 %v587
    %661 = vmatpush1.msra.mxu0 %v586
    %662 = vmatprep.subr.mxu0 %v591
    %663 = vmatpush1.msra.mxu0 %v590
    %664 = vmatprep.subr.mxu0 %v595
    %665 = vmatpush1.msra.mxu0 %v594
    %666 = vmatprep.subr.mxu0 %v599
    %667 = vmatpush1.msra.mxu0 %v598
    %668 = vmatprep.subr.mxu0 %v603
    %669 = vmatpush1.msra.mxu0 %v602
    %670 = vmatprep.subr.mxu0 %v607
    %671 = vmatpush1.msra.mxu0 %v606
    %672 = vmatprep.subr.mxu0 %v611
    %673 = vmatpush1.msra.mxu0 %v610
    %674 = vmatprep.subr.mxu0 %v615
    %675 = vmatpush1.msra.mxu0 %v614
    %676 = vmatprep.subr.mxu0 %v619
    %677 = vmatpush1.msra.mxu0 %v618
    %678 = vmatprep.subr.mxu0 %v623
    %679 = vmatpush1.msra.mxu0 %v622
    %680 = vmatprep.subr.mxu0 0.0
    %681 = vmatpush1.msra.mxu0 0.0
    %682 = vmatprep.subr.mxu0 0.0
    %683 = vmatpush1.msra.mxu0 0.0
    %684 = vmatprep.subr.mxu0 0.0
    %685 = vmatpush1.msra.mxu0 0.0
    %686 = vmatprep.subr.mxu0 0.0
    %687 = vmatpush1.msra.mxu0 0.0
    %688 = vmatprep.subr.mxu0 0.0
    %689 = vmatpush1.msra.mxu0 0.0
    %690 = vmatprep.subr.mxu0 0.0
    %691 = vmatpush1.msra.mxu0 0.0
    %692 = vmatprep.subr.mxu0 0.0
    %693 = vmatpush1.msra.mxu0 0.0
    %694 = vmatprep.subr.mxu0 0.0
    %695 = vmatpush1.msra.mxu0 0.0
    %696 = vmatprep.subr.mxu0 0.0
    %697 = vmatpush1.msra.mxu0 0.0
    %698 = vmatprep.subr.mxu0 0.0
    %699 = vmatpush1.msra.mxu0 0.0
    %700 = vmatprep.subr.mxu0 0.0
    %701 = vmatpush1.msra.mxu0 0.0
    %702 = vmatprep.subr.mxu0 0.0
    %703 = vmatpush1.msra.mxu0 0.0
    %704 = vmatprep.subr.mxu0 0.0
    %705 = vmatpush1.msra.mxu0 0.0
    %706 = vmatprep.subr.mxu0 0.0
    %707 = vmatpush1.msra.mxu0 0.0
    %708 = vmatprep.subr.mxu0 0.0
    %709 = vmatpush1.msra.mxu0 0.0
    %710 = vmatprep.subr.mxu0 0.0
    %711 = vmatpush1.msra.mxu0 0.0
    %712 = vmatprep.mubr.f32.mxu0 0.0
    %713 = vmatmul.mubr.f32.gmra.mrb[0].mxu0 %v561
    %v714 = vpop.f32.mrb[0].mxu0
    %v715 = vadd.f32 %v631, %v714
    %v716 = vpop.f32.mrb[0].mxu0
    %v717 = vadd.f32 %v635, %v716
    %718 = vdwg.mxu0
    %719 = vmatprep.subr.mxu0 %v565
    %720 = vmatpush1.msra.mxu0 %v564
    %721 = vmatprep.subr.mxu0 %v569
    %722 = vmatpush1.msra.mxu0 %v568
    %723 = vmatprep.subr.mxu0 %v573
    %724 = vmatpush1.msra.mxu0 %v572
    %725 = vmatprep.subr.mxu0 %v577
    %726 = vmatpush1.msra.mxu0 %v576
    %727 = vmatprep.subr.mxu0 %v581
    %728 = vmatpush1.msra.mxu0 %v580
    %729 = vmatprep.subr.mxu0 %v585
    %730 = vmatpush1.msra.mxu0 %v584
    %731 = vmatprep.subr.mxu0 %v589
    %732 = vmatpush1.msra.mxu0 %v588
    %733 = vmatprep.subr.mxu0 %v593
    %734 = vmatpush1.msra.mxu0 %v592
    %735 = vmatprep.subr.mxu0 %v597
    %736 = vmatpush1.msra.mxu0 %v596
    %737 = vmatprep.subr.mxu0 %v601
    %738 = vmatpush1.msra.mxu0 %v600
    %739 = vmatprep.subr.mxu0 %v605
    %740 = vmatpush1.msra.mxu0 %v604
    %741 = vmatprep.subr.mxu0 %v609
    %742 = vmatpush1.msra.mxu0 %v608
    %743 = vmatprep.subr.mxu0 %v613
    %744 = vmatpush1.msra.mxu0 %v612
    %745 = vmatprep.subr.mxu0 %v617
    %746 = vmatpush1.msra.mxu0 %v616
    %747 = vmatprep.subr.mxu0 %v621
    %748 = vmatpush1.msra.mxu0 %v620
    %749 = vmatprep.subr.mxu0 %v625
    %750 = vmatpush1.msra.mxu0 %v624
    %751 = vmatprep.subr.mxu0 0.0
    %752 = vmatpush1.msra.mxu0 0.0
    %753 = vmatprep.subr.mxu0 0.0
    %754 = vmatpush1.msra.mxu0 0.0
    %755 = vmatprep.subr.mxu0 0.0
    %756 = vmatpush1.msra.mxu0 0.0
    %757 = vmatprep.subr.mxu0 0.0
    %758 = vmatpush1.msra.mxu0 0.0
    %759 = vmatprep.subr.mxu0 0.0
    %760 = vmatpush1.msra.mxu0 0.0
    %761 = vmatprep.subr.mxu0 0.0
    %762 = vmatpush1.msra.mxu0 0.0
    %763 = vmatprep.subr.mxu0 0.0
    %764 = vmatpush1.msra.mxu0 0.0
    %765 = vmatprep.subr.mxu0 0.0
    %766 = vmatpush1.msra.mxu0 0.0
    %767 = vmatprep.subr.mxu0 0.0
    %768 = vmatpush1.msra.mxu0 0.0
    %769 = vmatprep.subr.mxu0 0.0
    %770 = vmatpush1.msra.mxu0 0.0
    %771 = vmatprep.subr.mxu0 0.0
    %772 = vmatpush1.msra.mxu0 0.0
    %773 = vmatprep.subr.mxu0 0.0
    %774 = vmatpush1.msra.mxu0 0.0
    %775 = vmatprep.subr.mxu0 0.0
    %776 = vmatpush1.msra.mxu0 0.0
    %777 = vmatprep.subr.mxu0 0.0
    %778 = vmatpush1.msra.mxu0 0.0
    %779 = vmatprep.subr.mxu0 0.0
    %780 = vmatpush1.msra.mxu0 0.0
    %781 = vmatprep.subr.mxu0 0.0
    %782 = vmatpush1.msra.mxu0 0.0
    %783 = vmatprep.mubr.f32.mxu0 0.0
    %784 = vmatmul.mubr.f32.gmra.mrb[0].mxu0 %v561
    %v785 = vpop.f32.mrb[0].mxu0
    %v786 = vadd.f32 %v639, %v785
    %v787 = vpop.f32.mrb[0].mxu0
    %v788 = vadd.f32 %v643, %v787
    %789 = vdwg.mxu0
    %v790 = vmax.f32 %v715, 0.0
    %v791 = vmax.f32 %v717, 0.0
    %v792 = vmax.f32 %v786, 0.0
    %v793 = vmax.f32 %v788, 0.0
    %v798 = vcombine.low %v790, %v791
    %v799 = vcombine.low %v792, %v793
    %v801 = vunpack.c.l.s4 1983009808
    %v802 = vunpack.c.0.s8 %v801
    %v803 = vlaneseq
    %v804 = vshrl.u32 %v803, 7
    %v805 = vsub.s32 %v802, %v804
    %v806 = vrot.slane %v798, %v805
    %v808 = vunpack.c.l.s4 1983009808
    %v809 = vunpack.c.0.s8 %v808
    %v810 = vlaneseq
    %v811 = vshrl.u32 %v810, 7
    %v812 = vsub.s32 %v809, %v811
    %v813 = vrot.slane %v799, %v812
    %v814 = vcombine.low %v806, %v813
    %816 = vst [vmem:[%s11] sm:$0xff] %v814
    // Predicated region
    $region42: #{data_embedding2_forward.1} parent=1 // pred_check
      _
    $region43: #{data_embedding2_forward.1} parent=1 // pred_check_branch
      %818 = sbr.rel (0) target = $region45
    $region44: #{data_embedding2_forward.1} parent=1 // pred_region
      _
    $region45: #{data_embedding2_forward.1} parent=1 // pred_fallthru
      _
    // Predicated region
    $region46: #{data_embedding2_forward.1} parent=1 // pred_check
      _
    $region47: #{data_embedding2_forward.1} parent=1 // pred_check_branch
      %820 = sbr.rel (0) target = $region49
    $region48: #{data_embedding2_forward.1} parent=1 // pred_region
      _
    $region49: #{data_embedding2_forward.1} parent=1 // pred_fallthru
      _
    // Predicated region
    $region50: #{data_embedding2_forward.1} parent=1 // pred_check
      _
    $region51: #{data_embedding2_forward.1} parent=1 // pred_check_branch
      %822 = sbr.rel (0) target = $region53
    $region52: #{data_embedding2_forward.1} parent=1 // pred_region
      _
    $region53: #{data_embedding2_forward.1} parent=1 // pred_fallthru
      _
    // Predicated region
    $region54: #{data_embedding2_forward.1} parent=1 // pred_check
      _
    $region55: #{data_embedding2_forward.1} parent=1 // pred_check_branch
      %824 = sbr.rel (0) target = $region57
    $region56: #{data_embedding2_forward.1} parent=1 // pred_region
      _
    $region57: #{data_embedding2_forward.1} parent=1 // pred_fallthru
      _
    // Predicated region
    $region58: #{data_embedding2_forward.1} parent=1 // pred_check
      _
    $region59: #{data_embedding2_forward.1} parent=1 // pred_check_branch
      %826 = sbr.rel (0) target = $region61
    $region60: #{data_embedding2_forward.1} parent=1 // pred_region
      _
    $region61: #{data_embedding2_forward.1} parent=1 // pred_fallthru
      _
    // Predicated region
    $region62: #{data_embedding2_forward.1} parent=1 // pred_check
      _
    $region63: #{data_embedding2_forward.1} parent=1 // pred_check_branch
      %828 = sbr.rel (0) target = $region65
    $region64: #{data_embedding2_forward.1} parent=1 // pred_region
      _
    $region65: #{data_embedding2_forward.1} parent=1 // pred_fallthru
      _
    %829 = vsyncpa [#allocation3], 1

</llo_original>
